<compile_context>
chip_gen: v5e
topology: v5e:2x2
jax: 0.10.0
libtpu: 0.0.40
codegen_flags: <defaults>
</compile_context>

<pallas_src>
import math

import jax
import jax.numpy as jnp
from jax.experimental import pallas as pl
from jax.experimental.pallas import tpu as pltpu

_TARGET_TILE_BYTES = 2 << 20   # ~2 MiB input tile per grid step (v5e-safe)
_MIN_GRID_STEPS = 8            # v7x: 2 TCs x >=2 pipelined iterations each


def _zero_kernel(x_ref, o_ref):
    # Pure VPU multiply; the kernel is DMA-bound so this is free.  Keeping the
    # read+multiply preserves PyTorch's NaN/Inf propagation exactly.
    o_ref[...] = x_ref[...] * jnp.zeros((), dtype=o_ref.dtype)


def _cdiv(a, b):
    return -(-a // b)


def _round_up(a, b):
    return _cdiv(a, b) * b


def _pick_2d_view(shape4d):
    """Free (bitcast) 2D factorization of the element count, lane-dense if possible."""
    total = math.prod(shape4d)
    for lane in (512, 256, 128):
        if total % lane == 0:
            return total // lane, lane
    # Odd element count: natural trailing-dim view (lower lane utilization,
    # but still zero-copy and correct).
    n, c, h, w = shape4d
    return n * c * h, w


def zero_forward(x, stride, exact_nan_semantics=True):
    """Pallas equivalent of Zero(stride)(x) for NCHW input x."""
    n, c, h, w = x.shape
    dtype = x.dtype
    if stride != 1:
        out_4d = (n, c, _cdiv(h, stride), _cdiv(w, stride))
    else:
        out_4d = (n, c, h, w)

    total_out = math.prod(out_4d)
    if total_out == 0:
        return jnp.zeros(out_4d, dtype)

    if not exact_nan_semantics:
        # Review fast path: result is all zeros; skip the HBM read (and the
        # kernel) entirely -- XLA lowers this to a broadcasted constant.
        return jnp.zeros(out_4d, dtype)

    if stride != 1:
        # TODO(synk): fuse the strided spatial subsample into the kernel via a
        # manual strided DMA; BlockSpec cannot express the H-stride without a
        # size-1 second-to-last block, and the wrapper slice costs one extra
        # subsampled-tensor write+read in HBM.
        x = x[:, :, ::stride, ::stride]

    rows, lane = _pick_2d_view(out_4d)
    x2d = x.reshape(rows, lane)                 # free view of a contiguous array

    itemsize = jnp.dtype(dtype).itemsize
    row_mult = 8 * max(1, 4 // itemsize)        # f32 -> 8, bf16 -> 16, int8 -> 32

    # ~2 MiB input tiles, but prefer >= _MIN_GRID_STEPS grid steps when possible.
    rows_for_bytes = max(
        row_mult,
        (_TARGET_TILE_BYTES // (lane * itemsize)) // row_mult * row_mult,
    )
    rows_for_steps = max(row_mult, _round_up(_cdiv(rows, _MIN_GRID_STEPS), row_mult))
    tile_rows = min(rows_for_bytes, rows_for_steps)
    if tile_rows >= rows:
        tile_rows = rows                        # single full-extent block

    grid = (_cdiv(rows, tile_rows),)            # remainder block handled by masking

    out2d = pl.pallas_call(
        _zero_kernel,
        out_shape=jax.ShapeDtypeStruct((rows, lane), dtype),
        grid_spec=pltpu.PrefetchScalarGridSpec(
            num_scalar_prefetch=0,
            grid=grid,
            in_specs=[pl.BlockSpec((tile_rows, lane), lambda i: (i, 0))],
            out_specs=pl.BlockSpec((tile_rows, lane), lambda i: (i, 0)),
        ),
        compiler_params=pltpu.CompilerParams(
            dimension_semantics=("parallel",),
        ),
        cost_estimate=pl.CostEstimate(
            flops=total_out,
            transcendentals=0,
            bytes_accessed=2 * total_out * itemsize,
        ),
    )(x2d)

    return out2d.reshape(out_4d)


if __name__ == "__main__":
    key = jax.random.PRNGKey(0)
    x = jax.random.normal(key, (2, 4, 16, 16), dtype=jnp.float32)

    # stride == 1 path
    y1 = jax.block_until_ready(zero_forward(x, stride=1))
    assert y1.shape == (2, 4, 16, 16)
    assert bool(jnp.all(y1 == 0.0))

    # stride == 2 path (spatial subsample, then * 0.0 in kernel)
    y2 = jax.block_until_ready(zero_forward(x, stride=2))
    assert y2.shape == (2, 4, 8, 8)
    assert bool(jnp.all(y2 == 0.0))

    # NaN/Inf propagation matches PyTorch (x * 0.0 keeps NaN)
    x_nan = x.at[0, 0, 0, 0].set(jnp.nan)
    y_nan = jax.block_until_ready(zero_forward(x_nan, stride=1))
    assert bool(jnp.isnan(y_nan[0, 0, 0, 0]))

    # Multi-step grid + masked remainder block (rows not divisible by tile)
    x_big = jax.random.normal(key, (2, 8, 36, 16), dtype=jnp.float32)
    y_big = jax.block_until_ready(zero_forward(x_big, stride=1))
    assert y_big.shape == (2, 8, 36, 16)
    assert bool(jnp.all(y_big == 0.0))

    # Read-free fast path (no NaN propagation required): no pallas_call at all.
    y_fast = jax.block_until_ready(zero_forward(x, stride=2, exact_nan_semantics=False))
    assert y_fast.shape == (2, 4, 8, 8)
    assert bool(jnp.all(y_fast == 0.0))

    print("KERNEL_OK")
</pallas_src>

<mosaic_0001>
module attributes {stable_mosaic.version = 11 : i64} {
  func.func @_zero_kernel(%arg0: i32, %arg1: memref<4x512xf32, #tpu.memory_space<vmem>>, %arg2: memref<4x512xf32, #tpu.memory_space<vmem>>) attributes {dimension_semantics = [#tpu.dimension_semantics<parallel>], iteration_bounds = array<i64: 1>, scalar_prefetch = 0 : i64, scratch_operands = 0 : i64, tpu.core_type = #tpu.core_type<tc>, window_params = [{transform_indices = @transform_0, window_bounds = array<i64: 4, 512>}, {transform_indices = @transform_1, window_bounds = array<i64: 4, 512>}]} {
    %c0 = arith.constant 0 : index
    %c0_0 = arith.constant 0 : index
    %0 = vector.load %arg1[%c0, %c0_0] : memref<4x512xf32, #tpu.memory_space<vmem>>, vector<4x512xf32>
    %cst = arith.constant 0.000000e+00 : f32
    %1 = vector.broadcast %cst : f32 to vector<4x512xf32>
    %2 = arith.mulf %0, %1 : vector<4x512xf32>
    %c0_1 = arith.constant 0 : index
    %c0_2 = arith.constant 0 : index
    %3 = vector.load %arg2[%c0_1, %c0_2] : memref<4x512xf32, #tpu.memory_space<vmem>>, vector<4x512xf32>
    tpu.vector_store %arg2[%c0_1, %c0_2], %2 {strides = array<i32>} : memref<4x512xf32, #tpu.memory_space<vmem>>, vector<4x512xf32>,
    return
  }
  func.func @transform_0(%arg0: i32) -> (i32, i32) {
    %c0_i32 = arith.constant 0 : i32
    %c0_i32_0 = arith.constant 0 : i32
    return %arg0, %c0_i32 : i32, i32
  }
  func.func @transform_1(%arg0: i32) -> (i32, i32) {
    %c0_i32 = arith.constant 0 : i32
    %c0_i32_0 = arith.constant 0 : i32
    return %arg0, %c0_i32 : i32, i32
  }
}

</mosaic_0001>

<llo_original>
// kernel: tpu_custom_call.1
$region0: #{tpu_custom_call.1}
  #allocation0 [shape = 'u32[]', space=smem, size = 0x4, offset = 0x4, fixed_abs, tag = 'smem constant byte address 0x4 - core index']
  #allocation1 [shape = 'u32[72,128]{1,0:T(1,128)}', space=vmem, size = 0x9000, scoped, tag = 'internal scratch']
  %s0 = inlined_call_operand.hbm [shape: f32[4,512], index: 0, kind: input, shape index: {}]
  %s1 = inlined_call_operand.hbm [shape: f32[4,512], index: 1, kind: output, shape index: {}]
  %s2 = sld [smem:[#allocation0]]
  $region18: #{tpu_custom_call.1} parent=0
    _
  %s4 = ssub.s32 1, %s2
  %s5 = scalar_select 0, %s4, %s2
  $region1: #{tpu_custom_call.1} parent=0
    #allocation2 [shape = 'u8[8192]{0}', space=vmem, size = 0x2000, scoped, tag = 'input window, operand 0, single buffered']
    #allocation3 [shape = 's32[1]{0}', space=sflag, size = 0x4, scoped, tag = 'scoped memory for tpu_custom_call.1']
    #allocation4 [shape = 's32[1]{0}', space=sflag, size = 0x4, scoped, tag = 'scoped memory for tpu_custom_call.1']
    #allocation5 [shape = 'u8[8192]{0}', space=vmem, size = 0x2000, scoped, tag = 'output window, operand 0, single buffered']
    %6 = vsyncpa [#allocation3], 0
    %7 = vsyncpa [#allocation4], 0
    // Predicated region
    $region2: #{tpu_custom_call.1} parent=1 // pred_check
      _
    $region3: #{tpu_custom_call.1} parent=1 // pred_check_branch
      %9 = sbr.rel (0) target = $region5
    $region4: #{tpu_custom_call.1} parent=1 // pred_region
      %11 = vsyncadd [#allocation3], 0
      %s13 = sshll.u32 %s0, 4
      %s14 = int_to_ptr.hbm [resolvable:$true] %s13
      %s15 = sshll.u32 [#allocation2], 4
      %s16 = int_to_ptr.vmem [resolvable:$true] %s15
      %18 = dma.hbm_to_vmem [thread:$0]  %s14, 256, %s16, [#allocation3]
    $region5: #{tpu_custom_call.1} parent=1 // pred_fallthru
      _
    // Predicated region
    $region6: #{tpu_custom_call.1} parent=1 // pred_check
      _
    $region7: #{tpu_custom_call.1} parent=1 // pred_check_branch
      %20 = sbr.rel (0) target = $region9
    $region8: #{tpu_custom_call.1} parent=1 // pred_region
      %22 = dma.done [#allocation3], 256
    $region9: #{tpu_custom_call.1} parent=1 // pred_fallthru
      _
    %v23 = vld [vmem:[#allocation2] sm:$0xff]
    %v24 = vld [vmem:[#allocation2 + $0x8] sm:$0xff]
    %v25 = vmul.f32 %v23, 0.0
    %v26 = vmul.f32 %v24, 0.0
    %27 = vst [vmem:[#allocation5] sm:$0xff] %v25
    %28 = vst [vmem:[#allocation5 + $0x8] sm:$0xff] %v26
    // Predicated region
    $region10: #{tpu_custom_call.1} parent=1 // pred_check
      _
    $region11: #{tpu_custom_call.1} parent=1 // pred_check_branch
      %30 = sbr.rel (0) target = $region13
    $region12: #{tpu_custom_call.1} parent=1 // pred_region
      %32 = vsyncadd [#allocation4], 0
      %s34 = sshll.u32 [#allocation5], 4
      %s35 = int_to_ptr.vmem [resolvable:$true] %s34
      %s36 = sshll.u32 %s1, 4
      %s37 = int_to_ptr.hbm [resolvable:$true] %s36
      %39 = dma.vmem_to_hbm [thread:$0]  %s35, 256, %s37, [#allocation4]
    $region13: #{tpu_custom_call.1} parent=1 // pred_fallthru
      _
    // Predicated region
    $region14: #{tpu_custom_call.1} parent=1 // pred_check
      _
    $region15: #{tpu_custom_call.1} parent=1 // pred_check_branch
      %41 = sbr.rel (0) target = $region17
    $region16: #{tpu_custom_call.1} parent=1 // pred_region
      %43 = dma.done [#allocation4], 256
    $region17: #{tpu_custom_call.1} parent=1 // pred_fallthru
      _
    %44 = vsyncpa [#allocation3], 1
    %45 = vsyncpa [#allocation4], 1

</llo_original>
